<compile_context>
chip_gen: v6e
topology: v6e:2x2x1
jax: 0.10.0
libtpu: 0.0.40
codegen_flags: <defaults>
</compile_context>

<pallas_src>
import jax
import jax.numpy as jnp
from jax.experimental import pallas as pl
from jax.experimental.pallas import tpu as pltpu


def _round_up(x, m):
    return ((x + m - 1) // m) * m


def _device_kind():
    try:
        return jax.devices()[0].device_kind.lower()
    except Exception:
        return ""


def _select_tiling(B, P, CKK, ODp):
    """Device-aware, VMEM-budget-driven batch tile + compiler limits."""
    kind = _device_kind()
    is_v7 = "v7" in kind
    is_v5 = "v5" in kind
    if is_v7:
        vmem_limit = 56 * 1024 * 1024    # 64 MiB physical: leave headroom
        budget = 44 * 1024 * 1024
    else:
        vmem_limit = 100 * 1024 * 1024   # v5e/v6e: 128 MiB physical
        budget = 88 * 1024 * 1024
    m_target = 512 if is_v5 else 256     # MXU row-fill target

    # Resident (single-buffered) operands: weight + mask (bf16) + bias (f32).
    resident = CKK * ODp * 2 + ODp * ODp * 2 + ODp * 4

    def fits(bt, patch_bufs=2):
        per_step = bt * P * CKK * 2 * patch_bufs + bt * P * ODp * 4 * 2
        return resident + per_step <= budget

    divisors = [d for d in range(1, B + 1) if B % d == 0]
    fitting = [d for d in divisors if fits(d)] or [1]

    if B * P <= m_target or not is_v7:
        bt = max(fitting)                       # biggest M that fits the budget
    else:
        multi = [d for d in fitting if B // d >= 2]   # v7x: 2 TCs want >=2 steps
        bt = max(multi or fitting)

    n_steps = B // bt
    patch_bufs = 3 if (not is_v7 and n_steps > 2 and fits(bt, 3)) else None
    return bt, vmem_limit, patch_bufs


def _spec(shape, index_map, buffers=None):
    """BlockSpec with optional explicit pipeline depth (graceful fallback)."""
    if buffers is not None:
        try:
            return pl.BlockSpec(shape, index_map, pipeline_mode=pl.Buffered(buffers))
        except (TypeError, AttributeError):
            pass
    return pl.BlockSpec(shape, index_map)


def primary_caps_kernel(patches_ref, w_ref, bias_ref, mask_ref, out_ref):
    # patches_ref: (Bt, P, CKK)  bf16 im2col patches (natural width, no pad)
    # w_ref:       (CKK, ODp)    bf16 fused conv weights (lanes OD..ODp are 0)
    # bias_ref:    (1, ODp)      f32  fused bias (padded lanes 0), VMEM-resident
    # mask_ref:    (ODp, ODp)    bf16 block-diagonal 0/1 group-sum matrix
    # out_ref:     (Bt, P, ODp)  f32  squashed capsules (padded lanes are 0)
    bt, p, ckk = patches_ref.shape
    x = patches_ref[...].reshape(bt * p, ckk)            # leading-dim merge only
    # Conv-as-matmul over all O*D capsule units at once (lane-dense MXU N).
    s = jnp.dot(x, w_ref[...], preferred_element_type=jnp.float32)       # (M, ODp)
    s = s + bias_ref[...]                                # f32 bias, free VPU add
    # Per-capsule squared norm broadcast over its D lanes (bf16 MXU group-sum).
    ss = (s * s).astype(jnp.bfloat16)
    sq = jnp.dot(ss, mask_ref[...], preferred_element_type=jnp.float32)  # (M, ODp)
    # squash: sq/(1+sq) * s / (sqrt(sq)+eps), fused into one EUP reciprocal.
    denom = (1.0 + sq) * (jnp.sqrt(sq) + 1e-8)
    out = s * (sq * pl.reciprocal(denom, approx=True))
    out_ref[...] = out.reshape(bt, p, -1).astype(out_ref.dtype)


def im2col_nchw(x, K, stride):
    """(B, C, H, W) -> (B, Ho*Wo, C*K*K) with k = c*K*K + ki*K + kj."""
    B, C, H, W = x.shape
    Ho = (H - K) // stride + 1
    Wo = (W - K) // stride + 1
    cols = []
    for ki in range(K):
        for kj in range(K):
            cols.append(x[:, :, ki:ki + stride * Ho:stride, kj:kj + stride * Wo:stride])
    patches = jnp.stack(cols, axis=2)                  # (B, C, K*K, Ho, Wo)
    patches = patches.reshape(B, C * K * K, Ho * Wo)   # k = c*K*K + (ki*K + kj)
    return patches.transpose(0, 2, 1), Ho, Wo          # (B, P, C*K*K)


def primary_capsules(x, weight, bias, *, kernel_size, stride):
    """weight: (D, O, C, K, K) = dim_caps stacked Conv2d weights; bias: (D, O)."""
    D, O, C, K, _ = weight.shape
    # im2col on bf16 input: the patch tensor hits HBM exactly once, in bf16.
    patches, Ho, Wo = im2col_nchw(x.astype(jnp.bfloat16), kernel_size, stride)
    B, P, CKK = patches.shape
    OD = O * D
    ODp = _round_up(OD, 128)

    # Weights: (D, O, C, K, K) -> (CKK, O*D) with column index = o*D + d.
    w_flat = weight.reshape(D, O, CKK).transpose(2, 1, 0).reshape(CKK, OD)
    w_pad = jnp.pad(w_flat.astype(jnp.bfloat16), ((0, 0), (0, ODp - OD)))
    # Bias stays f32 and is added in-kernel (more precise than bf16 folding).
    bias_pad = jnp.pad(bias.T.reshape(1, OD).astype(jnp.float32),
                       ((0, 0), (0, ODp - OD)))
    # Block-diagonal 0/1 matrix: ones within each D-sized capsule lane group.
    gid = jnp.arange(ODp) // D
    mask = (gid[:, None] == gid[None, :]).astype(jnp.bfloat16)

    Bt, vmem_limit, patch_bufs = _select_tiling(B, P, CKK, ODp)
    grid = (B // Bt,)

    def build(use_buffering):
        pbuf = patch_bufs if use_buffering else None
        cbuf = 1 if use_buffering else None
        return pl.pallas_call(
            primary_caps_kernel,
            out_shape=jax.ShapeDtypeStruct((B, P, ODp), jnp.float32),
            grid_spec=pltpu.PrefetchScalarGridSpec(
                num_scalar_prefetch=0,
                grid=grid,
                in_specs=[
                    _spec((Bt, P, CKK), lambda i: (i, 0, 0), pbuf),
                    # Constant block index -> VMEM-resident across grid steps;
                    # single-buffered so the big weight is not duplicated.
                    _spec((CKK, ODp), lambda i: (0, 0), cbuf),
                    _spec((1, ODp), lambda i: (0, 0), cbuf),
                    _spec((ODp, ODp), lambda i: (0, 0), cbuf),
                ],
                out_specs=pl.BlockSpec((Bt, P, ODp), lambda i: (i, 0, 0)),
            ),
            compiler_params=pltpu.CompilerParams(
                dimension_semantics=("parallel",),
                vmem_limit_bytes=vmem_limit,
            ),
        )

    try:
        out = build(True)(patches, w_pad, bias_pad, mask)
    except Exception:
        # Fallback without explicit pipeline depths (keeps the kernel runnable
        # if the installed Pallas rejects Buffered(1) on resident operands).
        out = build(False)(patches, w_pad, bias_pad, mask)

    # Lane-dense (B, P, O*D) -> PyTorch (B, O*Ho*Wo, D) layout (module semantics).
    out = out[:, :, :OD].reshape(B, P, O, D)
    out = out.transpose(0, 2, 1, 3).reshape(B, O * P, D)
    return out


if __name__ == "__main__":
    # Small shapes consistent with the module: kernel_size=9, stride=2, padding=0.
    B, C, H, W = 2, 4, 16, 16       # input NCHW
    O, D, K, S = 8, 8, 9, 2         # out_channels, dim_caps, kernel, stride
    key = jax.random.PRNGKey(0)
    kx, kw, kb = jax.random.split(key, 3)
    x = jax.random.normal(kx, (B, C, H, W), jnp.float32)
    # Deterministic synthetic parameters (one Conv2d per capsule dim, stacked).
    weight = jax.random.normal(kw, (D, O, C, K, K), jnp.float32) * 0.05
    bias = jax.random.normal(kb, (D, O), jnp.float32) * 0.05

    out = jax.block_until_ready(
        primary_capsules(x, weight, bias, kernel_size=K, stride=S))

    # Pure-JAX f32 reference (exact module semantics) for a silent sanity check.
    patches_f32, Ho, Wo = im2col_nchw(x, K, S)
    w_ref = weight.reshape(D, O, -1).transpose(1, 2, 0)          # (O, CKK, D)
    s_ref = jnp.einsum('bpk,okd->bopd', patches_f32, w_ref,
                       precision=jax.lax.Precision.HIGHEST) + bias.T[None, :, None, :]
    s_ref = s_ref.reshape(B, O * Ho * Wo, D)
    sq = jnp.sum(s_ref ** 2, axis=-1, keepdims=True)
    ref = sq / (1.0 + sq) * s_ref / (jnp.sqrt(sq) + 1e-8)

    assert out.shape == (B, O * Ho * Wo, D)
    # Kernel uses bf16 operands (f32 accumulate), so tolerance is bf16-scale.
    assert jnp.allclose(out, ref, atol=2e-2, rtol=2e-2), \
        float(jnp.max(jnp.abs(out - ref)))
    print("KERNEL_OK")
</pallas_src>

<mosaic_0001>
module attributes {stable_mosaic.version = 11 : i64} {
  func.func @primary_caps_kernel(%arg0: i32, %arg1: memref<2x16x324xbf16, #tpu.memory_space<vmem>>, %arg2: memref<324x128xbf16, #tpu.memory_space<vmem>>, %arg3: memref<1x128xf32, #tpu.memory_space<vmem>>, %arg4: memref<128x128xbf16, #tpu.memory_space<vmem>>, %arg5: memref<2x16x128xf32, #tpu.memory_space<vmem>>) attributes {dimension_semantics = [#tpu.dimension_semantics<parallel>], iteration_bounds = array<i64: 1>, scalar_prefetch = 0 : i64, scratch_operands = 0 : i64, tpu.core_type = #tpu.core_type<tc>, window_params = [{transform_indices = @transform_0, window_bounds = array<i64: 2, 16, 324>}, {pipeline_mode = #tpu.pipeline_mode<synchronous>, transform_indices = @transform_1, window_bounds = array<i64: 324, 128>}, {pipeline_mode = #tpu.pipeline_mode<synchronous>, transform_indices = @transform_2, window_bounds = array<i64: 1, 128>}, {pipeline_mode = #tpu.pipeline_mode<synchronous>, transform_indices = @transform_3, window_bounds = array<i64: 128, 128>}, {transform_indices = @transform_4, window_bounds = array<i64: 2, 16, 128>}]} {
    %c0 = arith.constant 0 : index
    %c0_0 = arith.constant 0 : index
    %c0_1 = arith.constant 0 : index
    %0 = vector.load %arg1[%c0, %c0_0, %c0_1] : memref<2x16x324xbf16, #tpu.memory_space<vmem>>, vector<2x16x324xbf16>
    %1 = vector.shape_cast %0 : vector<2x16x324xbf16> to vector<32x324xbf16>
    %c0_2 = arith.constant 0 : index
    %c0_3 = arith.constant 0 : index
    %2 = vector.load %arg2[%c0_2, %c0_3] : memref<324x128xbf16, #tpu.memory_space<vmem>>, vector<324x128xbf16>
    %cst = arith.constant dense<0.000000e+00> : vector<32x128xf32>
    %3 = tpu.matmul %1, %2, %cst {dimension_numbers = #tpu.dot_dimension_numbers<[1], [0], [0], [1], [0, 0, 1, 1], [], []>} : vector<32x324xbf16>, vector<324x128xbf16>, vector<32x128xf32> -> vector<32x128xf32>
    %c0_4 = arith.constant 0 : index
    %c0_5 = arith.constant 0 : index
    %4 = vector.load %arg3[%c0_4, %c0_5] : memref<1x128xf32, #tpu.memory_space<vmem>>, vector<1x128xf32>
    %5 = vector.broadcast %4 : vector<1x128xf32> to vector<32x128xf32>
    %6 = arith.addf %3, %5 : vector<32x128xf32>
    %7 = arith.mulf %6, %6 : vector<32x128xf32>
    %8 = arith.truncf %7 : vector<32x128xf32> to vector<32x128xbf16>
    %c0_6 = arith.constant 0 : index
    %c0_7 = arith.constant 0 : index
    %9 = vector.load %arg4[%c0_6, %c0_7] : memref<128x128xbf16, #tpu.memory_space<vmem>>, vector<128x128xbf16>
    %cst_8 = arith.constant dense<0.000000e+00> : vector<32x128xf32>
    %10 = tpu.matmul %8, %9, %cst_8 {dimension_numbers = #tpu.dot_dimension_numbers<[1], [0], [0], [1], [0, 0, 1, 1], [], []>} : vector<32x128xbf16>, vector<128x128xbf16>, vector<32x128xf32> -> vector<32x128xf32>
    %cst_9 = arith.constant 1.000000e+00 : f32
    %11 = vector.broadcast %cst_9 : f32 to vector<32x128xf32>
    %12 = arith.addf %11, %10 : vector<32x128xf32>
    %13 = math.sqrt %10 : vector<32x128xf32>
    %cst_10 = arith.constant 9.99999993E-9 : f32
    %14 = vector.broadcast %cst_10 : f32 to vector<32x128xf32>
    %15 = arith.addf %13, %14 : vector<32x128xf32>
    %16 = arith.mulf %12, %15 : vector<32x128xf32>
    %17 = tpu.reciprocal %16 {approx = true} : vector<32x128xf32> -> vector<32x128xf32>
    %18 = arith.mulf %10, %17 : vector<32x128xf32>
    %19 = arith.mulf %6, %18 : vector<32x128xf32>
    %20 = vector.shape_cast %19 : vector<32x128xf32> to vector<2x16x128xf32>
    %c0_11 = arith.constant 0 : index
    %c0_12 = arith.constant 0 : index
    %c0_13 = arith.constant 0 : index
    %21 = vector.load %arg5[%c0_11, %c0_12, %c0_13] : memref<2x16x128xf32, #tpu.memory_space<vmem>>, vector<2x16x128xf32>
    tpu.vector_store %arg5[%c0_11, %c0_12, %c0_13], %20 {strides = array<i32>} : memref<2x16x128xf32, #tpu.memory_space<vmem>>, vector<2x16x128xf32>,
    return
  }
  func.func @transform_0(%arg0: i32) -> (i32, i32, i32) {
    %c0_i32 = arith.constant 0 : i32
    %c0_i32_0 = arith.constant 0 : i32
    %c0_i32_1 = arith.constant 0 : i32
    return %arg0, %c0_i32, %c0_i32_0 : i32, i32, i32
  }
  func.func @transform_1(%arg0: i32) -> (i32, i32) {
    %c0_i32 = arith.constant 0 : i32
    %c0_i32_0 = arith.constant 0 : i32
    %c0_i32_1 = arith.constant 0 : i32
    return %c0_i32, %c0_i32_0 : i32, i32
  }
  func.func @transform_2(%arg0: i32) -> (i32, i32) {
    %c0_i32 = arith.constant 0 : i32
    %c0_i32_0 = arith.constant 0 : i32
    %c0_i32_1 = arith.constant 0 : i32
    return %c0_i32, %c0_i32_0 : i32, i32
  }
  func.func @transform_3(%arg0: i32) -> (i32, i32) {
    %c0_i32 = arith.constant 0 : i32
    %c0_i32_0 = arith.constant 0 : i32
    %c0_i32_1 = arith.constant 0 : i32
    return %c0_i32, %c0_i32_0 : i32, i32
  }
  func.func @transform_4(%arg0: i32) -> (i32, i32, i32) {
    %c0_i32 = arith.constant 0 : i32
    %c0_i32_0 = arith.constant 0 : i32
    %c0_i32_1 = arith.constant 0 : i32
    return %arg0, %c0_i32, %c0_i32_0 : i32, i32, i32
  }
}

module attributes {stable_mosaic.version = 11 : i64} {
  func.func @primary_caps_kernel(%arg0: i32, %arg1: memref<2x16x324xbf16, #tpu.memory_space<vmem>>, %arg2: memref<324x128xbf16, #tpu.memory_space<vmem>>, %arg3: memref<1x128xf32, #tpu.memory_space<vmem>>, %arg4: memref<128x128xbf16, #tpu.memory_space<vmem>>, %arg5: memref<2x16x128xf32, #tpu.memory_space<vmem>>) attributes {dimension_semantics = [#tpu.dimension_semantics<parallel>], iteration_bounds = array<i64: 1>, scalar_prefetch = 0 : i64, scratch_operands = 0 : i64, tpu.core_type = #tpu.core_type<tc>, window_params = [{transform_indices = @transform_0, window_bounds = array<i64: 2, 16, 324>}, {pipeline_mode = #tpu.pipeline_mode<synchronous>, transform_indices = @transform_1, window_bounds = array<i64: 324, 128>}, {pipeline_mode = #tpu.pipeline_mode<synchronous>, transform_indices = @transform_2, window_bounds = array<i64: 1, 128>}, {pipeline_mode = #tpu.pipeline_mode<synchronous>, transform_indices = @transform_3, window_bounds = array<i64: 128, 128>}, {transform_indices = @transform_4, window_bounds = array<i64: 2, 16, 128>}]} {
    %c0 = arith.constant 0 : index
    %c0_0 = arith.constant 0 : index
    %c0_1 = arith.constant 0 : index
    %0 = vector.load %arg1[%c0, %c0_0, %c0_1] : memref<2x16x324xbf16, #tpu.memory_space<vmem>>, vector<2x16x324xbf16>
    %1 = vector.shape_cast %0 : vector<2x16x324xbf16> to vector<32x324xbf16>
    %c0_2 = arith.constant 0 : index
    %c0_3 = arith.constant 0 : index
    %2 = vector.load %arg2[%c0_2, %c0_3] : memref<324x128xbf16, #tpu.memory_space<vmem>>, vector<324x128xbf16>
    %cst = arith.constant dense<0.000000e+00> : vector<32x128xf32>
    %3 = tpu.matmul %1, %2, %cst {dimension_numbers = #tpu.dot_dimension_numbers<[1], [0], [0], [1], [0, 0, 1, 1], [], []>} : vector<32x324xbf16>, vector<324x128xbf16>, vector<32x128xf32> -> vector<32x128xf32>
    %c0_4 = arith.constant 0 : index
    %c0_5 = arith.constant 0 : index
    %4 = vector.load %arg3[%c0_4, %c0_5] : memref<1x128xf32, #tpu.memory_space<vmem>>, vector<1x128xf32>
    %5 = vector.broadcast %4 : vector<1x128xf32> to vector<32x128xf32>
    %6 = arith.addf %3, %5 : vector<32x128xf32>
    %7 = arith.mulf %6, %6 : vector<32x128xf32>
    %8 = arith.truncf %7 : vector<32x128xf32> to vector<32x128xbf16>
    %c0_6 = arith.constant 0 : index
    %c0_7 = arith.constant 0 : index
    %9 = vector.load %arg4[%c0_6, %c0_7] : memref<128x128xbf16, #tpu.memory_space<vmem>>, vector<128x128xbf16>
    %cst_8 = arith.constant dense<0.000000e+00> : vector<32x128xf32>
    %10 = tpu.matmul %8, %9, %cst_8 {dimension_numbers = #tpu.dot_dimension_numbers<[1], [0], [0], [1], [0, 0, 1, 1], [], []>} : vector<32x128xbf16>, vector<128x128xbf16>, vector<32x128xf32> -> vector<32x128xf32>
    %cst_9 = arith.constant 1.000000e+00 : f32
    %11 = vector.broadcast %cst_9 : f32 to vector<32x128xf32>
    %12 = arith.addf %11, %10 : vector<32x128xf32>
    %13 = math.sqrt %10 : vector<32x128xf32>
    %cst_10 = arith.constant 9.99999993E-9 : f32
    %14 = vector.broadcast %cst_10 : f32 to vector<32x128xf32>
    %15 = arith.addf %13, %14 : vector<32x128xf32>
    %16 = arith.mulf %12, %15 : vector<32x128xf32>
    %17 = tpu.reciprocal %16 {approx = true} : vector<32x128xf32> -> vector<32x128xf32>
    %18 = arith.mulf %10, %17 : vector<32x128xf32>
    %19 = arith.mulf %6, %18 : vector<32x128xf32>
    %20 = vector.shape_cast %19 : vector<32x128xf32> to vector<2x16x128xf32>
    %c0_11 = arith.constant 0 : index
    %c0_12 = arith.constant 0 : index
    %c0_13 = arith.constant 0 : index
    %21 = vector.load %arg5[%c0_11, %c0_12, %c0_13] : memref<2x16x128xf32, #tpu.memory_space<vmem>>, vector<2x16x128xf32>
    tpu.vector_store %arg5[%c0_11, %c0_12, %c0_13], %20 {strides = array<i32>} : memref<2x16x128xf32, #tpu.memory_space<vmem>>, vector<2x16x128xf32>,
    return
  }
  func.func @transform_0(%arg0: i32) -> (i32, i32, i32) {
    %c0_i32 = arith.constant 0 : i32
    %c0_i32_0 = arith.constant 0 : i32
    %c0_i32_1 = arith.constant 0 : i32
    return %arg0, %c0_i32, %c0_i32_0 : i32, i32, i32
  }
  func.func @transform_1(%arg0: i32) -> (i32, i32) {
    %c0_i32 = arith.constant 0 : i32
    %c0_i32_0 = arith.constant 0 : i32
    %c0_i32_1 = arith.constant 0 : i32
    return %c0_i32, %c0_i32_0 : i32, i32
  }
  func.func @transform_2(%arg0: i32) -> (i32, i32) {
    %c0_i32 = arith.constant 0 : i32
    %c0_i32_0 = arith.constant 0 : i32
    %c0_i32_1 = arith.constant 0 : i32
    return %c0_i32, %c0_i32_0 : i32, i32
  }
  func.func @transform_3(%arg0: i32) -> (i32, i32) {
    %c0_i32 = arith.constant 0 : i32
    %c0_i32_0 = arith.constant 0 : i32
    %c0_i32_1 = arith.constant 0 : i32
    return %c0_i32, %c0_i32_0 : i32, i32
  }
  func.func @transform_4(%arg0: i32) -> (i32, i32, i32) {
    %c0_i32 = arith.constant 0 : i32
    %c0_i32_0 = arith.constant 0 : i32
    %c0_i32_1 = arith.constant 0 : i32
    return %arg0, %c0_i32, %c0_i32_0 : i32, i32, i32
  }
}

</mosaic_0001>

<llo_original>
// kernel: tpu_custom_call.1
$region0: #{tpu_custom_call.1}
  #allocation0 [shape = 'u32[]', space=smem, size = 0x4, offset = 0x4, fixed_abs, tag = 'smem constant byte address 0x4 - core index']
  #allocation1 [shape = 'u32[144,128]{1,0:T(1,128)}', space=vmem, size = 0x12000, scoped, tag = 'internal scratch']
  %s0 = inlined_call_operand.hbm [shape: bf16[2,16,324], index: 0, kind: input, shape index: {}]
  %s1 = inlined_call_operand.hbm [shape: bf16[324,128], index: 1, kind: input, shape index: {}]
  %s2 = inlined_call_operand.vmem [shape: f32[1,128], index: 2, kind: input, shape index: {}]
  %s3 = inlined_call_operand.hbm [shape: bf16[128,128], index: 3, kind: input, shape index: {}]
  %s4 = inlined_call_operand.hbm [shape: f32[2,16,128], index: 4, kind: output, shape index: {}]
  %s5 = sld [smem:[#allocation0]]
  $region38: #{tpu_custom_call.1} parent=0
    _
  %s7 = ssub.s32 1, %s5
  %s8 = scalar_select 0, %s7, %s5
  $region1: #{tpu_custom_call.1} parent=0
    #allocation2 [shape = 'u8[24576]{0}', space=vmem, size = 0x6000, scoped, tag = 'input window, operand 0, single buffered']
    #allocation3 [shape = 's32[1]{0}', space=sflag, size = 0x4, scoped, tag = 'scoped memory for tpu_custom_call.1']
    #allocation4 [shape = 's32[1]{0}', space=sflag, size = 0x4, scoped, tag = 'scoped memory for tpu_custom_call.1']
    #allocation5 [shape = 'u8[83968]{0}', space=vmem, size = 0x14800, scoped, tag = 'input window, operand 1, single buffered']
    #allocation6 [shape = 's32[1]{0}', space=sflag, size = 0x4, scoped, tag = 'scoped memory for tpu_custom_call.1']
    #allocation7 [shape = 'u8[32768]{0}', space=vmem, size = 0x8000, scoped, tag = 'input window, operand 3, single buffered']
    #allocation8 [shape = 'u8[16384]{0}', space=vmem, size = 0x4000, scoped, tag = 'output window, operand 0, single buffered']
    %9 = vsyncpa [#allocation3], 0
    %10 = vsyncpa [#allocation6], 0
    %11 = vsyncpa [#allocation4], 0
    // Predicated region
    $region2: #{tpu_custom_call.1} parent=1 // pred_check
      _
    $region3: #{tpu_custom_call.1} parent=1 // pred_check_branch
      %13 = sbr.rel (0) target = $region5
    $region4: #{tpu_custom_call.1} parent=1 // pred_region
      %s15 = ssub.s32 768, 768
      %16 = vsyncadd [#allocation3], %s15
      %s17 = sshll.u32 [#allocation2], 4
      %s18 = int_to_ptr.vmem [resolvable:$true] %s17
      %23 = dma.hbm_to_vmem [thread:$0]  %s0, 768, %s18, [#allocation3], 192, 192, 12
    $region5: #{tpu_custom_call.1} parent=1 // pred_fallthru
      _
    // Predicated region
    $region6: #{tpu_custom_call.1} parent=1 // pred_check
      _
    $region7: #{tpu_custom_call.1} parent=1 // pred_check_branch
      %25 = sbr.rel (0) target = $region9
    $region8: #{tpu_custom_call.1} parent=1 // pred_region
      %s27 = ssub.s32 2624, 2624
      %28 = vsyncadd [#allocation6], %s27
      %s29 = sshll.u32 [#allocation5], 4
      %s30 = int_to_ptr.vmem [resolvable:$true] %s29
      %35 = dma.hbm_to_vmem [thread:$0]  %s1, 2624, %s30, [#allocation6], 64, 64, 4
    $region9: #{tpu_custom_call.1} parent=1 // pred_fallthru
      _
    // Predicated region
    $region10: #{tpu_custom_call.1} parent=1 // pred_check
      _
    $region11: #{tpu_custom_call.1} parent=1 // pred_check_branch
      %37 = sbr.rel (0) target = $region13
    $region12: #{tpu_custom_call.1} parent=1 // pred_region
      _
    $region13: #{tpu_custom_call.1} parent=1 // pred_fallthru
      _
    // Predicated region
    $region14: #{tpu_custom_call.1} parent=1 // pred_check
      _
    $region15: #{tpu_custom_call.1} parent=1 // pred_check_branch
      %39 = sbr.rel (0) target = $region17
    $region16: #{tpu_custom_call.1} parent=1 // pred_region
      %s41 = ssub.s32 1024, 1024
      %42 = vsyncadd [#allocation6], %s41
      %s43 = sshll.u32 [#allocation7], 4
      %s44 = int_to_ptr.vmem [resolvable:$true] %s43
      %49 = dma.hbm_to_vmem [thread:$0]  %s3, 1024, %s44, [#allocation6], 64, 64, 4
    $region17: #{tpu_custom_call.1} parent=1 // pred_fallthru
      _
    // Predicated region
    $region18: #{tpu_custom_call.1} parent=1 // pred_check
      _
    $region19: #{tpu_custom_call.1} parent=1 // pred_check_branch
      %51 = sbr.rel (0) target = $region21
    $region20: #{tpu_custom_call.1} parent=1 // pred_region
      %52 = dma.done [#allocation3], 768
    $region21: #{tpu_custom_call.1} parent=1 // pred_fallthru
      _
    // Predicated region
    $region22: #{tpu_custom_call.1} parent=1 // pred_check
      _
    $region23: #{tpu_custom_call.1} parent=1 // pred_check_branch
      %54 = sbr.rel (0) target = $region25
    $region24: #{tpu_custom_call.1} parent=1 // pred_region
      %55 = dma.done [#allocation6], 2624
    $region25: #{tpu_custom_call.1} parent=1 // pred_fallthru
      _
    // Predicated region
    $region26: #{tpu_custom_call.1} parent=1 // pred_check
      _
    $region27: #{tpu_custom_call.1} parent=1 // pred_check_branch
      %57 = sbr.rel (0) target = $region29
    $region28: #{tpu_custom_call.1} parent=1 // pred_region
      %58 = dma.done [#allocation6], 1024
    $region29: #{tpu_custom_call.1} parent=1 // pred_fallthru
      _
    %v60 = vld [vmem:[#allocation2] sm:$0xff]
    %v61 = vld [vmem:[#allocation2 + $0x8] sm:$0xf]
    %v62 = vld [vmem:[#allocation2 + $0xc] sm:$0xff]
    %v63 = vld [vmem:[#allocation2 + $0x14] sm:$0xf]
    %v64 = vld [vmem:[#allocation2 + $0x18] sm:$0xff]
    %v65 = vld [vmem:[#allocation2 + $0x20] sm:$0xf]
    %v66 = vld [vmem:[#allocation2 + $0x24] sm:$0xff]
    %v67 = vld [vmem:[#allocation2 + $0x2c] sm:$0xf]
    %v68 = vld [vmem:[#allocation5] sm:$0xf]
    %v69 = vld [vmem:[#allocation5 + $0x4] sm:$0xf]
    %v70 = vld [vmem:[#allocation5 + $0x8] sm:$0xf]
    %v71 = vld [vmem:[#allocation5 + $0xc] sm:$0xf]
    %v72 = vld [vmem:[#allocation5 + $0x10] sm:$0xf]
    %v73 = vld [vmem:[#allocation5 + $0x14] sm:$0xf]
    %v74 = vld [vmem:[#allocation5 + $0x18] sm:$0xf]
    %v75 = vld [vmem:[#allocation5 + $0x1c] sm:$0xf]
    %v76 = vld [vmem:[#allocation5 + $0x20] sm:$0xf]
    %v77 = vld [vmem:[#allocation5 + $0x24] sm:$0xf]
    %v78 = vld [vmem:[#allocation5 + $0x28] sm:$0xf]
    %v79 = vld [vmem:[#allocation5 + $0x2c] sm:$0xf]
    %v80 = vld [vmem:[#allocation5 + $0x30] sm:$0xf]
    %v81 = vld [vmem:[#allocation5 + $0x34] sm:$0xf]
    %v82 = vld [vmem:[#allocation5 + $0x38] sm:$0xf]
    %v83 = vld [vmem:[#allocation5 + $0x3c] sm:$0xf]
    %v84 = vld [vmem:[#allocation5 + $0x40] sm:$0xf]
    %v85 = vld [vmem:[#allocation5 + $0x44] sm:$0xf]
    %v86 = vld [vmem:[#allocation5 + $0x48] sm:$0xf]
    %v87 = vld [vmem:[#allocation5 + $0x4c] sm:$0xf]
    %v88 = vld [vmem:[#allocation5 + $0x50] sm:$0xf]
    %v89 = vld [vmem:[#allocation5 + $0x54] sm:$0xf]
    %v90 = vld [vmem:[#allocation5 + $0x58] sm:$0xf]
    %v91 = vld [vmem:[#allocation5 + $0x5c] sm:$0xf]
    %v92 = vld [vmem:[#allocation5 + $0x60] sm:$0xf]
    %v93 = vld [vmem:[#allocation5 + $0x64] sm:$0xf]
    %v94 = vld [vmem:[#allocation5 + $0x68] sm:$0xf]
    %v95 = vld [vmem:[#allocation5 + $0x6c] sm:$0xf]
    %v96 = vld [vmem:[#allocation5 + $0x70] sm:$0xf]
    %v97 = vld [vmem:[#allocation5 + $0x74] sm:$0xf]
    %v98 = vld [vmem:[#allocation5 + $0x78] sm:$0xf]
    %v99 = vld [vmem:[#allocation5 + $0x7c] sm:$0xf]
    %v100 = vld [vmem:[#allocation5 + $0x80] sm:$0xf]
    %v101 = vld [vmem:[#allocation5 + $0x84] sm:$0xf]
    %v102 = vld [vmem:[#allocation5 + $0x88] sm:$0xf]
    %v103 = vld [vmem:[#allocation5 + $0x8c] sm:$0xf]
    %v104 = vld [vmem:[#allocation5 + $0x90] sm:$0xf]
    %v105 = vld [vmem:[#allocation5 + $0x94] sm:$0xf]
    %v106 = vld [vmem:[#allocation5 + $0x98] sm:$0xf]
    %v107 = vld [vmem:[#allocation5 + $0x9c] sm:$0xf]
    %v108 = vld [vmem:[#allocation5 + $0xa0] sm:$0x3]
    %v109 = vld [vmem:[%s2] sm:$0x1]
    %v111 = vlaneseq
    %v112 = vshrl.u32 %v111, 7
    %v113 = vsub.s32 0, %v112
    %v114 = vrot.slane %v109, %v113
    %v124 = vunpack.c.l.b16 %v60
    %v125 = vunpack.c.h.b16 %v60
    %v126 = vunpack.c.l.b16 %v61
    %v127 = vunpack.c.l.b16 %v62
    %v128 = vunpack.c.h.b16 %v62
    %v129 = vunpack.c.l.b16 %v63
    %v130 = vunpack.c.l.b16 %v64
    %v131 = vunpack.c.h.b16 %v64
    %v132 = vunpack.c.l.b16 %v65
    %v133 = vunpack.c.l.b16 %v66
    %v134 = vunpack.c.h.b16 %v66
    %v135 = vunpack.c.l.b16 %v67
    %v136 = vpack.c.b16 %v127, %v124
    %v137 = vpack.c.b16 %v128, %v125
    %v138 = vpack.c.b16 %v129, %v126
    %v139 = vpack.c.b16 %v133, %v130
    %v140 = vpack.c.b16 %v134, %v131
    %v141 = vpack.c.b16 %v135, %v132
    %v187 = vunpack.c.l.b16 %v68
    %v188 = vunpack.c.l.b16 %v69
    %v189 = vunpack.c.l.b16 %v70
    %v190 = vunpack.c.l.b16 %v71
    %v191 = vunpack.c.l.b16 %v72
    %v192 = vunpack.c.l.b16 %v73
    %v193 = vunpack.c.l.b16 %v74
    %v194 = vunpack.c.l.b16 %v75
    %v195 = vunpack.c.l.b16 %v76
    %v196 = vunpack.c.l.b16 %v77
    %v197 = vunpack.c.l.b16 %v78
    %v198 = vunpack.c.l.b16 %v79
    %v199 = vunpack.c.l.b16 %v80
    %v200 = vunpack.c.l.b16 %v81
    %v201 = vunpack.c.l.b16 %v82
    %v202 = vunpack.c.l.b16 %v83
    %v203 = vunpack.c.l.b16 %v84
    %v204 = vunpack.c.l.b16 %v85
    %v205 = vunpack.c.l.b16 %v86
    %v206 = vunpack.c.l.b16 %v87
    %v207 = vunpack.c.l.b16 %v88
    %v208 = vunpack.c.l.b16 %v89
    %v209 = vunpack.c.l.b16 %v90
    %v210 = vunpack.c.l.b16 %v91
    %v211 = vunpack.c.l.b16 %v92
    %v212 = vunpack.c.l.b16 %v93
    %v213 = vunpack.c.l.b16 %v94
    %v214 = vunpack.c.l.b16 %v95
    %v215 = vunpack.c.l.b16 %v96
    %v216 = vunpack.c.l.b16 %v97
    %v217 = vunpack.c.l.b16 %v98
    %v218 = vunpack.c.l.b16 %v99
    %v219 = vunpack.c.l.b16 %v100
    %v220 = vunpack.c.l.b16 %v101
    %v221 = vunpack.c.l.b16 %v102
    %v222 = vunpack.c.l.b16 %v103
    %v223 = vunpack.c.l.b16 %v104
    %v224 = vunpack.c.l.b16 %v105
    %v225 = vunpack.c.l.b16 %v106
    %v226 = vunpack.c.l.b16 %v107
    %v227 = vunpack.c.l.b16 %v108
    %v228 = vpack.c.b16 %v188, %v187
    %v229 = vpack.c.b16 %v190, %v189
    %v230 = vpack.c.b16 %v192, %v191
    %v231 = vpack.c.b16 %v194, %v193
    %v232 = vpack.c.b16 %v196, %v195
    %v233 = vpack.c.b16 %v198, %v197
    %v234 = vpack.c.b16 %v200, %v199
    %v235 = vpack.c.b16 %v202, %v201
    %v236 = vpack.c.b16 %v204, %v203
    %v237 = vpack.c.b16 %v206, %v205
    %v238 = vpack.c.b16 %v208, %v207
    %v239 = vpack.c.b16 %v210, %v209
    %v240 = vpack.c.b16 %v212, %v211
    %v241 = vpack.c.b16 %v214, %v213
    %v242 = vpack.c.b16 %v216, %v215
    %v243 = vpack.c.b16 %v218, %v217
    %v244 = vpack.c.b16 %v220, %v219
    %v245 = vpack.c.b16 %v222, %v221
    %v246 = vpack.c.b16 %v224, %v223
    %v247 = vpack.c.b16 %v226, %v225
    %v248 = vpack.c.b16 %v227, %v227
    %vm269 = vcmask 556032
    %v271 = vsel %vm269, %v138, 0
    %v274 = vsel %vm269, %v141, 0
    %vm276 = vcmask 1041408
    %v278 = vsel %vm276, %v248, 0
    %280 = vmatprep.subr.bf16.mxu0 0
    %281 = vmatpush1.bf16.msra.mxu0 %v235
    %282 = vmatprep.subr.bf16.mxu0 0
    %283 = vmatpush1.bf16.msra.mxu0 %v234
    %284 = vmatprep.subr.bf16.mxu0 0
    %285 = vmatpush1.bf16.msra.mxu0 %v233
    %286 = vmatprep.subr.bf16.mxu0 0
    %287 = vmatpush1.bf16.msra.mxu0 %v232
    %288 = vmatprep.subr.bf16.mxu0 0
    %289 = vmatpush1.bf16.msra.mxu0 %v231
    %290 = vmatprep.subr.bf16.mxu0 0
    %291 = vmatpush1.bf16.msra.mxu0 %v230
    %292 = vmatprep.subr.bf16.mxu0 0
    %293 = vmatpush1.bf16.msra.mxu0 %v229
    %294 = vmatprep.subr.bf16.mxu0 0
    %295 = vmatpush1.bf16.msra.mxu0 %v228
    %296 = vmatprep.subr.bf16.mxu0 0
    %297 = vmatpush2.bf16.msra.mxu0 %v243
    %298 = vmatprep.subr.bf16.mxu0 0
    %299 = vmatpush2.bf16.msra.mxu0 %v242
    %300 = vmatprep.subr.bf16.mxu0 0
    %301 = vmatpush2.bf16.msra.mxu0 %v241
    %302 = vmatprep.subr.bf16.mxu0 0
    %303 = vmatpush2.bf16.msra.mxu0 %v240
    %304 = vmatprep.subr.bf16.mxu0 0
    %305 = vmatpush2.bf16.msra.mxu0 %v239
    %306 = vmatprep.subr.bf16.mxu0 0
    %307 = vmatpush2.bf16.msra.mxu0 %v238
    %308 = vmatprep.subr.bf16.mxu0 0
    %309 = vmatpush2.bf16.msra.mxu0 %v237
    %310 = vmatprep.subr.bf16.mxu0 0
    %311 = vmatpush2.bf16.msra.mxu0 %v236
    %312 = vmatprep.mubr.bf16.mxu0 %v137
    %313 = vmatmul.mubr.bf16.gmra.mxu0 %v136
    %v314 = vpop.f32.mrf.mxu0
    %v315 = vadd.f32 %v114, %v314
    %v316 = vpop.f32.mrf.mxu0
    %v317 = vpop.f32.mrf.mxu0
    %v318 = vadd.f32 %v114, %v317
    %v319 = vpop.f32.mrf.mxu0
    %320 = vmatprep.mubr.bf16.mxu0 %v140
    %321 = vmatmul.mubr.bf16.gmra.mxu0 %v139
    %v322 = vpop.f32.mrf.mxu0
    %v323 = vadd.f32 %v114, %v322
    %v324 = vpop.f32.mrf.mxu0
    %v325 = vpop.f32.mrf.mxu0
    %v326 = vadd.f32 %v114, %v325
    %v327 = vpop.f32.mrf.mxu0
    %328 = vdwg.mxu0
    %329 = vmatprep.subr.bf16.mxu0 0
    %330 = vmatpush1.bf16.msra.mxu0 0
    %331 = vmatprep.subr.bf16.mxu0 0
    %332 = vmatpush1.bf16.msra.mxu0 0
    %333 = vmatprep.subr.bf16.mxu0 0
    %334 = vmatpush1.bf16.msra.mxu0 0
    %335 = vmatprep.subr.bf16.mxu0 0
    %336 = vmatpush1.bf16.msra.mxu0 %v278
    %337 = vmatprep.subr.bf16.mxu0 0
    %338 = vmatpush1.bf16.msra.mxu0 %v247
    %339 = vmatprep.subr.bf16.mxu0 0
    %340 = vmatpush1.bf16.msra.mxu0 %v246
    %341 = vmatprep.subr.bf16.mxu0 0
    %342 = vmatpush1.bf16.msra.mxu0 %v245
    %343 = vmatprep.subr.bf16.mxu0 0
    %344 = vmatpush1.bf16.msra.mxu0 %v244
    %345 = vmatprep.subr.bf16.mxu0 0
    %346 = vmatpush2.bf16.msra.mxu0 0
    %347 = vmatprep.subr.bf16.mxu0 0
    %348 = vmatpush2.bf16.msra.mxu0 0
    %349 = vmatprep.subr.bf16.mxu0 0
    %350 = vmatpush2.bf16.msra.mxu0 0
    %351 = vmatprep.subr.bf16.mxu0 0
    %352 = vmatpush2.bf16.msra.mxu0 0
    %353 = vmatprep.subr.bf16.mxu0 0
    %354 = vmatpush2.bf16.msra.mxu0 0
    %355 = vmatprep.subr.bf16.mxu0 0
    %356 = vmatpush2.bf16.msra.mxu0 0
    %357 = vmatprep.subr.bf16.mxu0 0
    %358 = vmatpush2.bf16.msra.mxu0 0
    %359 = vmatprep.subr.bf16.mxu0 0
    %360 = vmatpush2.bf16.msra.mxu0 0
    %361 = vmatprep.mubr.bf16.mxu0 0
    %362 = vmatmul.mubr.bf16.gmra.mxu0 %v271
    %v363 = vpop.f32.mrf.mxu0
    %v364 = vadd.f32 %v315, %v363
    %v365 = vpop.f32.mrf.mxu0
    %v366 = vpop.f32.mrf.mxu0
    %v367 = vadd.f32 %v318, %v366
    %v368 = vpop.f32.mrf.mxu0
    %369 = vmatprep.mubr.bf16.mxu0 0
    %370 = vmatmul.mubr.bf16.gmra.mxu0 %v274
    %v371 = vpop.f32.mrf.mxu0
    %v372 = vadd.f32 %v323, %v371
    %v373 = vpop.f32.mrf.mxu0
    %v374 = vpop.f32.mrf.mxu0
    %v375 = vadd.f32 %v326, %v374
    %v376 = vpop.f32.mrf.mxu0
    %377 = vdwg.mxu0
    %v378 = vmul.f32 %v364, %v364
    %v379 = vmul.f32 %v367, %v367
    %v380 = vmul.f32 %v372, %v372
    %v381 = vmul.f32 %v375, %v375
    %v382 = vpack.c.bf16 %v379, %v378
    %v383 = vpack.c.bf16 %v381, %v380
    %v384 = vld [vmem:[#allocation7] sm:$0xf]
    %v385 = vld [vmem:[#allocation7 + $0x4] sm:$0xf]
    %v386 = vld [vmem:[#allocation7 + $0x8] sm:$0xf]
    %v387 = vld [vmem:[#allocation7 + $0xc] sm:$0xf]
    %v388 = vld [vmem:[#allocation7 + $0x10] sm:$0xf]
    %v389 = vld [vmem:[#allocation7 + $0x14] sm:$0xf]
    %v390 = vld [vmem:[#allocation7 + $0x18] sm:$0xf]
    %v391 = vld [vmem:[#allocation7 + $0x1c] sm:$0xf]
    %v392 = vld [vmem:[#allocation7 + $0x20] sm:$0xf]
    %v393 = vld [vmem:[#allocation7 + $0x24] sm:$0xf]
    %v394 = vld [vmem:[#allocation7 + $0x28] sm:$0xf]
    %v395 = vld [vmem:[#allocation7 + $0x2c] sm:$0xf]
    %v396 = vld [vmem:[#allocation7 + $0x30] sm:$0xf]
    %v397 = vld [vmem:[#allocation7 + $0x34] sm:$0xf]
    %v398 = vld [vmem:[#allocation7 + $0x38] sm:$0xf]
    %v399 = vld [vmem:[#allocation7 + $0x3c] sm:$0xf]
    %v416 = vunpack.c.l.b16 %v384
    %v417 = vunpack.c.l.b16 %v385
    %v418 = vunpack.c.l.b16 %v386
    %v419 = vunpack.c.l.b16 %v387
    %v420 = vunpack.c.l.b16 %v388
    %v421 = vunpack.c.l.b16 %v389
    %v422 = vunpack.c.l.b16 %v390
    %v423 = vunpack.c.l.b16 %v391
    %v424 = vunpack.c.l.b16 %v392
    %v425 = vunpack.c.l.b16 %v393
    %v426 = vunpack.c.l.b16 %v394
    %v427 = vunpack.c.l.b16 %v395
    %v428 = vunpack.c.l.b16 %v396
    %v429 = vunpack.c.l.b16 %v397
    %v430 = vunpack.c.l.b16 %v398
    %v431 = vunpack.c.l.b16 %v399
    %v432 = vpack.c.b16 %v417, %v416
    %v433 = vpack.c.b16 %v419, %v418
    %v434 = vpack.c.b16 %v421, %v420
    %v435 = vpack.c.b16 %v423, %v422
    %v436 = vpack.c.b16 %v425, %v424
    %v437 = vpack.c.b16 %v427, %v426
    %v438 = vpack.c.b16 %v429, %v428
    %v439 = vpack.c.b16 %v431, %v430
    %448 = vmatprep.subr.bf16.mxu0 0
    %449 = vmatpush1.bf16.msra.mxu0 %v439
    %450 = vmatprep.subr.bf16.mxu0 0
    %451 = vmatpush1.bf16.msra.mxu0 %v438
    %452 = vmatprep.subr.bf16.mxu0 0
    %453 = vmatpush1.bf16.msra.mxu0 %v437
    %454 = vmatprep.subr.bf16.mxu0 0
    %455 = vmatpush1.bf16.msra.mxu0 %v436
    %456 = vmatprep.subr.bf16.mxu0 0
    %457 = vmatpush1.bf16.msra.mxu0 %v435
    %458 = vmatprep.subr.bf16.mxu0 0
    %459 = vmatpush1.bf16.msra.mxu0 %v434
    %460 = vmatprep.subr.bf16.mxu0 0
    %461 = vmatpush1.bf16.msra.mxu0 %v433
    %462 = vmatprep.subr.bf16.mxu0 0
    %463 = vmatpush1.bf16.msra.mxu0 %v432
    %464 = vmatprep.subr.bf16.mxu0 0
    %465 = vmatpush2.bf16.msra.mxu0 0
    %466 = vmatprep.subr.bf16.mxu0 0
    %467 = vmatpush2.bf16.msra.mxu0 0
    %468 = vmatprep.subr.bf16.mxu0 0
    %469 = vmatpush2.bf16.msra.mxu0 0
    %470 = vmatprep.subr.bf16.mxu0 0
    %471 = vmatpush2.bf16.msra.mxu0 0
    %472 = vmatprep.subr.bf16.mxu0 0
    %473 = vmatpush2.bf16.msra.mxu0 0
    %474 = vmatprep.subr.bf16.mxu0 0
    %475 = vmatpush2.bf16.msra.mxu0 0
    %476 = vmatprep.subr.bf16.mxu0 0
    %477 = vmatpush2.bf16.msra.mxu0 0
    %478 = vmatprep.subr.bf16.mxu0 0
    %479 = vmatpush2.bf16.msra.mxu0 0
    %480 = vmatprep.mubr.bf16.mxu0 0
    %481 = vmatmul.mubr.bf16.gmra.mxu0 %v382
    %v482 = vpop.f32.mrf.mxu0
    %v483 = vadd.f32 0.0, %v482
    %v484 = vpop.f32.mrf.mxu0
    %v485 = vpop.f32.mrf.mxu0
    %v486 = vadd.f32 0.0, %v485
    %v487 = vpop.f32.mrf.mxu0
    %488 = vmatprep.mubr.bf16.mxu0 0
    %489 = vmatmul.mubr.bf16.gmra.mxu0 %v383
    %v490 = vpop.f32.mrf.mxu0
    %v491 = vadd.f32 0.0, %v490
    %v492 = vpop.f32.mrf.mxu0
    %v493 = vpop.f32.mrf.mxu0
    %v494 = vadd.f32 0.0, %v493
    %v495 = vpop.f32.mrf.mxu0
    %496 = vdwg.mxu0
    %v497 = vadd.f32 %v483, 1.0
    %v498 = vadd.f32 %v486, 1.0
    %v499 = vadd.f32 %v491, 1.0
    %v500 = vadd.f32 %v494, 1.0
    %v501 = vrsqrt.pop %v483
    %v502 = vmul.f32 %v483, %v501
    %vm503 = vcmp.eq.f32.partialorder %v483, inf
    %v504 = vsel %vm503, %v483, %v502
    %vm505 = vcmp.eq.f32.partialorder %v483, 0.0
    %v506 = vand.u32 %v483, 2147483648
    %v507 = vsel %vm505, %v506, %v504
    %v508 = vrsqrt.pop %v486
    %v509 = vmul.f32 %v486, %v508
    %vm510 = vcmp.eq.f32.partialorder %v486, inf
    %v511 = vsel %vm510, %v486, %v509
    %vm512 = vcmp.eq.f32.partialorder %v486, 0.0
    %v513 = vand.u32 %v486, 2147483648
    %v514 = vsel %vm512, %v513, %v511
    %v515 = vrsqrt.pop %v491
    %v516 = vmul.f32 %v491, %v515
    %vm517 = vcmp.eq.f32.partialorder %v491, inf
    %v518 = vsel %vm517, %v491, %v516
    %vm519 = vcmp.eq.f32.partialorder %v491, 0.0
    %v520 = vand.u32 %v491, 2147483648
    %v521 = vsel %vm519, %v520, %v518
    %v522 = vrsqrt.pop %v494
    %v523 = vmul.f32 %v494, %v522
    %vm524 = vcmp.eq.f32.partialorder %v494, inf
    %v525 = vsel %vm524, %v494, %v523
    %vm526 = vcmp.eq.f32.partialorder %v494, 0.0
    %v527 = vand.u32 %v494, 2147483648
    %v528 = vsel %vm526, %v527, %v525
    %v529 = vadd.f32 %v507, 1e-08
    %v530 = vadd.f32 %v514, 1e-08
    %v531 = vadd.f32 %v521, 1e-08
    %v532 = vadd.f32 %v528, 1e-08
    %v533 = vmul.f32 %v497, %v529
    %v534 = vmul.f32 %v498, %v530
    %v535 = vmul.f32 %v499, %v531
    %v536 = vmul.f32 %v500, %v532
    %v537 = vrcp.pop %v533
    %v538 = vrcp.pop %v534
    %v539 = vrcp.pop %v535
    %v540 = vrcp.pop %v536
    %v541 = vmul.f32 %v483, %v537
    %v542 = vmul.f32 %v486, %v538
    %v543 = vmul.f32 %v491, %v539
    %v544 = vmul.f32 %v494, %v540
    %v545 = vmul.f32 %v364, %v541
    %v546 = vmul.f32 %v367, %v542
    %v547 = vmul.f32 %v372, %v543
    %v548 = vmul.f32 %v375, %v544
    %549 = vst [vmem:[#allocation8] sm:$0xff] %v545
    %550 = vst [vmem:[#allocation8 + $0x8] sm:$0xff] %v546
    %551 = vst [vmem:[#allocation8 + $0x10] sm:$0xff] %v547
    %552 = vst [vmem:[#allocation8 + $0x18] sm:$0xff] %v548
    // Predicated region
    $region30: #{tpu_custom_call.1} parent=1 // pred_check
      _
    $region31: #{tpu_custom_call.1} parent=1 // pred_check_branch
      %554 = sbr.rel (0) target = $region33
    $region32: #{tpu_custom_call.1} parent=1 // pred_region
      %s556 = ssub.s32 512, 512
      %557 = vsyncadd [#allocation4], %s556
      %s558 = sshll.u32 [#allocation8], 4
      %s559 = int_to_ptr.vmem [resolvable:$true] %s558
      %564 = dma.vmem_to_hbm [thread:$0]  %s559, 512, %s4, [#allocation4], 128, 128, 8
    $region33: #{tpu_custom_call.1} parent=1 // pred_fallthru
      _
    // Predicated region
    $region34: #{tpu_custom_call.1} parent=1 // pred_check
      _
    $region35: #{tpu_custom_call.1} parent=1 // pred_check_branch
      %566 = sbr.rel (0) target = $region37
    $region36: #{tpu_custom_call.1} parent=1 // pred_region
      %567 = dma.done [#allocation4], 512
    $region37: #{tpu_custom_call.1} parent=1 // pred_fallthru
      _
    %568 = vsyncpa [#allocation3], 1
    %569 = vsyncpa [#allocation6], 1
    %570 = vsyncpa [#allocation4], 1

// kernel: tpu_custom_call.1
$region0: #{tpu_custom_call.1}
  #allocation0 [shape = 'u32[]', space=smem, size = 0x4, offset = 0x4, fixed_abs, tag = 'smem constant byte address 0x4 - core index']
  #allocation1 [shape = 'u32[144,128]{1,0:T(1,128)}', space=vmem, size = 0x12000, scoped, tag = 'internal scratch']
  %s0 = inlined_call_operand.hbm [shape: bf16[2,16,324], index: 0, kind: input, shape index: {}]
  %s1 = inlined_call_operand.hbm [shape: bf16[324,128], index: 1, kind: input, shape index: {}]
  %s2 = inlined_call_operand.vmem [shape: f32[1,128], index: 2, kind: input, shape index: {}]
  %s3 = inlined_call_operand.hbm [shape: bf16[128,128], index: 3, kind: input, shape index: {}]
  %s4 = inlined_call_operand.hbm [shape: f32[2,16,128], index: 4, kind: output, shape index: {}]
  %s5 = sld [smem:[#allocation0]]
  $region38: #{tpu_custom_call.1} parent=0
    _
  %s7 = ssub.s32 1, %s5
  %s8 = scalar_select 0, %s7, %s5
  $region1: #{tpu_custom_call.1} parent=0
    #allocation2 [shape = 'u8[24576]{0}', space=vmem, size = 0x6000, scoped, tag = 'input window, operand 0, single buffered']
    #allocation3 [shape = 's32[1]{0}', space=sflag, size = 0x4, scoped, tag = 'scoped memory for tpu_custom_call.1']
    #allocation4 [shape = 's32[1]{0}', space=sflag, size = 0x4, scoped, tag = 'scoped memory for tpu_custom_call.1']
    #allocation5 [shape = 'u8[83968]{0}', space=vmem, size = 0x14800, scoped, tag = 'input window, operand 1, single buffered']
    #allocation6 [shape = 's32[1]{0}', space=sflag, size = 0x4, scoped, tag = 'scoped memory for tpu_custom_call.1']
    #allocation7 [shape = 'u8[32768]{0}', space=vmem, size = 0x8000, scoped, tag = 'input window, operand 3, single buffered']
    #allocation8 [shape = 'u8[16384]{0}', space=vmem, size = 0x4000, scoped, tag = 'output window, operand 0, single buffered']
    %9 = vsyncpa [#allocation3], 0
    %10 = vsyncpa [#allocation6], 0
    %11 = vsyncpa [#allocation4], 0
    // Predicated region
    $region2: #{tpu_custom_call.1} parent=1 // pred_check
      _
    $region3: #{tpu_custom_call.1} parent=1 // pred_check_branch
      %13 = sbr.rel (0) target = $region5
    $region4: #{tpu_custom_call.1} parent=1 // pred_region
      %s15 = ssub.s32 768, 768
      %16 = vsyncadd [#allocation3], %s15
      %s17 = sshll.u32 [#allocation2], 4
      %s18 = int_to_ptr.vmem [resolvable:$true] %s17
      %23 = dma.hbm_to_vmem [thread:$0]  %s0, 768, %s18, [#allocation3], 192, 192, 12
    $region5: #{tpu_custom_call.1} parent=1 // pred_fallthru
      _
    // Predicated region
    $region6: #{tpu_custom_call.1} parent=1 // pred_check
      _
    $region7: #{tpu_custom_call.1} parent=1 // pred_check_branch
      %25 = sbr.rel (0) target = $region9
    $region8: #{tpu_custom_call.1} parent=1 // pred_region
      %s27 = ssub.s32 2624, 2624
      %28 = vsyncadd [#allocation6], %s27
      %s29 = sshll.u32 [#allocation5], 4
      %s30 = int_to_ptr.vmem [resolvable:$true] %s29
      %35 = dma.hbm_to_vmem [thread:$0]  %s1, 2624, %s30, [#allocation6], 64, 64, 4
    $region9: #{tpu_custom_call.1} parent=1 // pred_fallthru
      _
    // Predicated region
    $region10: #{tpu_custom_call.1} parent=1 // pred_check
      _
    $region11: #{tpu_custom_call.1} parent=1 // pred_check_branch
      %37 = sbr.rel (0) target = $region13
    $region12: #{tpu_custom_call.1} parent=1 // pred_region
      _
    $region13: #{tpu_custom_call.1} parent=1 // pred_fallthru
      _
    // Predicated region
    $region14: #{tpu_custom_call.1} parent=1 // pred_check
      _
    $region15: #{tpu_custom_call.1} parent=1 // pred_check_branch
      %39 = sbr.rel (0) target = $region17
    $region16: #{tpu_custom_call.1} parent=1 // pred_region
      %s41 = ssub.s32 1024, 1024
      %42 = vsyncadd [#allocation6], %s41
      %s43 = sshll.u32 [#allocation7], 4
      %s44 = int_to_ptr.vmem [resolvable:$true] %s43
      %49 = dma.hbm_to_vmem [thread:$0]  %s3, 1024, %s44, [#allocation6], 64, 64, 4
    $region17: #{tpu_custom_call.1} parent=1 // pred_fallthru
      _
    // Predicated region
    $region18: #{tpu_custom_call.1} parent=1 // pred_check
      _
    $region19: #{tpu_custom_call.1} parent=1 // pred_check_branch
      %51 = sbr.rel (0) target = $region21
    $region20: #{tpu_custom_call.1} parent=1 // pred_region
      %52 = dma.done [#allocation3], 768
    $region21: #{tpu_custom_call.1} parent=1 // pred_fallthru
      _
    // Predicated region
    $region22: #{tpu_custom_call.1} parent=1 // pred_check
      _
    $region23: #{tpu_custom_call.1} parent=1 // pred_check_branch
      %54 = sbr.rel (0) target = $region25
    $region24: #{tpu_custom_call.1} parent=1 // pred_region
      %55 = dma.done [#allocation6], 2624
    $region25: #{tpu_custom_call.1} parent=1 // pred_fallthru
      _
    // Predicated region
    $region26: #{tpu_custom_call.1} parent=1 // pred_check
      _
    $region27: #{tpu_custom_call.1} parent=1 // pred_check_branch
      %57 = sbr.rel (0) target = $region29
    $region28: #{tpu_custom_call.1} parent=1 // pred_region
      %58 = dma.done [#allocation6], 1024
    $region29: #{tpu_custom_call.1} parent=1 // pred_fallthru
      _
    %v60 = vld [vmem:[#allocation2] sm:$0xff]
    %v61 = vld [vmem:[#allocation2 + $0x8] sm:$0xf]
    %v62 = vld [vmem:[#allocation2 + $0xc] sm:$0xff]
    %v63 = vld [vmem:[#allocation2 + $0x14] sm:$0xf]
    %v64 = vld [vmem:[#allocation2 + $0x18] sm:$0xff]
    %v65 = vld [vmem:[#allocation2 + $0x20] sm:$0xf]
    %v66 = vld [vmem:[#allocation2 + $0x24] sm:$0xff]
    %v67 = vld [vmem:[#allocation2 + $0x2c] sm:$0xf]
    %v68 = vld [vmem:[#allocation5] sm:$0xf]
    %v69 = vld [vmem:[#allocation5 + $0x4] sm:$0xf]
    %v70 = vld [vmem:[#allocation5 + $0x8] sm:$0xf]
    %v71 = vld [vmem:[#allocation5 + $0xc] sm:$0xf]
    %v72 = vld [vmem:[#allocation5 + $0x10] sm:$0xf]
    %v73 = vld [vmem:[#allocation5 + $0x14] sm:$0xf]
    %v74 = vld [vmem:[#allocation5 + $0x18] sm:$0xf]
    %v75 = vld [vmem:[#allocation5 + $0x1c] sm:$0xf]
    %v76 = vld [vmem:[#allocation5 + $0x20] sm:$0xf]
    %v77 = vld [vmem:[#allocation5 + $0x24] sm:$0xf]
    %v78 = vld [vmem:[#allocation5 + $0x28] sm:$0xf]
    %v79 = vld [vmem:[#allocation5 + $0x2c] sm:$0xf]
    %v80 = vld [vmem:[#allocation5 + $0x30] sm:$0xf]
    %v81 = vld [vmem:[#allocation5 + $0x34] sm:$0xf]
    %v82 = vld [vmem:[#allocation5 + $0x38] sm:$0xf]
    %v83 = vld [vmem:[#allocation5 + $0x3c] sm:$0xf]
    %v84 = vld [vmem:[#allocation5 + $0x40] sm:$0xf]
    %v85 = vld [vmem:[#allocation5 + $0x44] sm:$0xf]
    %v86 = vld [vmem:[#allocation5 + $0x48] sm:$0xf]
    %v87 = vld [vmem:[#allocation5 + $0x4c] sm:$0xf]
    %v88 = vld [vmem:[#allocation5 + $0x50] sm:$0xf]
    %v89 = vld [vmem:[#allocation5 + $0x54] sm:$0xf]
    %v90 = vld [vmem:[#allocation5 + $0x58] sm:$0xf]
    %v91 = vld [vmem:[#allocation5 + $0x5c] sm:$0xf]
    %v92 = vld [vmem:[#allocation5 + $0x60] sm:$0xf]
    %v93 = vld [vmem:[#allocation5 + $0x64] sm:$0xf]
    %v94 = vld [vmem:[#allocation5 + $0x68] sm:$0xf]
    %v95 = vld [vmem:[#allocation5 + $0x6c] sm:$0xf]
    %v96 = vld [vmem:[#allocation5 + $0x70] sm:$0xf]
    %v97 = vld [vmem:[#allocation5 + $0x74] sm:$0xf]
    %v98 = vld [vmem:[#allocation5 + $0x78] sm:$0xf]
    %v99 = vld [vmem:[#allocation5 + $0x7c] sm:$0xf]
    %v100 = vld [vmem:[#allocation5 + $0x80] sm:$0xf]
    %v101 = vld [vmem:[#allocation5 + $0x84] sm:$0xf]
    %v102 = vld [vmem:[#allocation5 + $0x88] sm:$0xf]
    %v103 = vld [vmem:[#allocation5 + $0x8c] sm:$0xf]
    %v104 = vld [vmem:[#allocation5 + $0x90] sm:$0xf]
    %v105 = vld [vmem:[#allocation5 + $0x94] sm:$0xf]
    %v106 = vld [vmem:[#allocation5 + $0x98] sm:$0xf]
    %v107 = vld [vmem:[#allocation5 + $0x9c] sm:$0xf]
    %v108 = vld [vmem:[#allocation5 + $0xa0] sm:$0x3]
    %v109 = vld [vmem:[%s2] sm:$0x1]
    %v111 = vlaneseq
    %v112 = vshrl.u32 %v111, 7
    %v113 = vsub.s32 0, %v112
    %v114 = vrot.slane %v109, %v113
    %v124 = vunpack.c.l.b16 %v60
    %v125 = vunpack.c.h.b16 %v60
    %v126 = vunpack.c.l.b16 %v61
    %v127 = vunpack.c.l.b16 %v62
    %v128 = vunpack.c.h.b16 %v62
    %v129 = vunpack.c.l.b16 %v63
    %v130 = vunpack.c.l.b16 %v64
    %v131 = vunpack.c.h.b16 %v64
    %v132 = vunpack.c.l.b16 %v65
    %v133 = vunpack.c.l.b16 %v66
    %v134 = vunpack.c.h.b16 %v66
    %v135 = vunpack.c.l.b16 %v67
    %v136 = vpack.c.b16 %v127, %v124
    %v137 = vpack.c.b16 %v128, %v125
    %v138 = vpack.c.b16 %v129, %v126
    %v139 = vpack.c.b16 %v133, %v130
    %v140 = vpack.c.b16 %v134, %v131
    %v141 = vpack.c.b16 %v135, %v132
    %v187 = vunpack.c.l.b16 %v68
    %v188 = vunpack.c.l.b16 %v69
    %v189 = vunpack.c.l.b16 %v70
    %v190 = vunpack.c.l.b16 %v71
    %v191 = vunpack.c.l.b16 %v72
    %v192 = vunpack.c.l.b16 %v73
    %v193 = vunpack.c.l.b16 %v74
    %v194 = vunpack.c.l.b16 %v75
    %v195 = vunpack.c.l.b16 %v76
    %v196 = vunpack.c.l.b16 %v77
    %v197 = vunpack.c.l.b16 %v78
    %v198 = vunpack.c.l.b16 %v79
    %v199 = vunpack.c.l.b16 %v80
    %v200 = vunpack.c.l.b16 %v81
    %v201 = vunpack.c.l.b16 %v82
    %v202 = vunpack.c.l.b16 %v83
    %v203 = vunpack.c.l.b16 %v84
    %v204 = vunpack.c.l.b16 %v85
    %v205 = vunpack.c.l.b16 %v86
    %v206 = vunpack.c.l.b16 %v87
    %v207 = vunpack.c.l.b16 %v88
    %v208 = vunpack.c.l.b16 %v89
    %v209 = vunpack.c.l.b16 %v90
    %v210 = vunpack.c.l.b16 %v91
    %v211 = vunpack.c.l.b16 %v92
    %v212 = vunpack.c.l.b16 %v93
    %v213 = vunpack.c.l.b16 %v94
    %v214 = vunpack.c.l.b16 %v95
    %v215 = vunpack.c.l.b16 %v96
    %v216 = vunpack.c.l.b16 %v97
    %v217 = vunpack.c.l.b16 %v98
    %v218 = vunpack.c.l.b16 %v99
    %v219 = vunpack.c.l.b16 %v100
    %v220 = vunpack.c.l.b16 %v101
    %v221 = vunpack.c.l.b16 %v102
    %v222 = vunpack.c.l.b16 %v103
    %v223 = vunpack.c.l.b16 %v104
    %v224 = vunpack.c.l.b16 %v105
    %v225 = vunpack.c.l.b16 %v106
    %v226 = vunpack.c.l.b16 %v107
    %v227 = vunpack.c.l.b16 %v108
    %v228 = vpack.c.b16 %v188, %v187
    %v229 = vpack.c.b16 %v190, %v189
    %v230 = vpack.c.b16 %v192, %v191
    %v231 = vpack.c.b16 %v194, %v193
    %v232 = vpack.c.b16 %v196, %v195
    %v233 = vpack.c.b16 %v198, %v197
    %v234 = vpack.c.b16 %v200, %v199
    %v235 = vpack.c.b16 %v202, %v201
    %v236 = vpack.c.b16 %v204, %v203
    %v237 = vpack.c.b16 %v206, %v205
    %v238 = vpack.c.b16 %v208, %v207
    %v239 = vpack.c.b16 %v210, %v209
    %v240 = vpack.c.b16 %v212, %v211
    %v241 = vpack.c.b16 %v214, %v213
    %v242 = vpack.c.b16 %v216, %v215
    %v243 = vpack.c.b16 %v218, %v217
    %v244 = vpack.c.b16 %v220, %v219
    %v245 = vpack.c.b16 %v222, %v221
    %v246 = vpack.c.b16 %v224, %v223
    %v247 = vpack.c.b16 %v226, %v225
    %v248 = vpack.c.b16 %v227, %v227
    %vm269 = vcmask 556032
    %v271 = vsel %vm269, %v138, 0
    %v274 = vsel %vm269, %v141, 0
    %vm276 = vcmask 1041408
    %v278 = vsel %vm276, %v248, 0
    %280 = vmatprep.subr.bf16.mxu0 0
    %281 = vmatpush1.bf16.msra.mxu0 %v235
    %282 = vmatprep.subr.bf16.mxu0 0
    %283 = vmatpush1.bf16.msra.mxu0 %v234
    %284 = vmatprep.subr.bf16.mxu0 0
    %285 = vmatpush1.bf16.msra.mxu0 %v233
    %286 = vmatprep.subr.bf16.mxu0 0
    %287 = vmatpush1.bf16.msra.mxu0 %v232
    %288 = vmatprep.subr.bf16.mxu0 0
    %289 = vmatpush1.bf16.msra.mxu0 %v231
    %290 = vmatprep.subr.bf16.mxu0 0
    %291 = vmatpush1.bf16.msra.mxu0 %v230
    %292 = vmatprep.subr.bf16.mxu0 0
    %293 = vmatpush1.bf16.msra.mxu0 %v229
    %294 = vmatprep.subr.bf16.mxu0 0
    %295 = vmatpush1.bf16.msra.mxu0 %v228
    %296 = vmatprep.subr.bf16.mxu0 0
    %297 = vmatpush2.bf16.msra.mxu0 %v243
    %298 = vmatprep.subr.bf16.mxu0 0
    %299 = vmatpush2.bf16.msra.mxu0 %v242
    %300 = vmatprep.subr.bf16.mxu0 0
    %301 = vmatpush2.bf16.msra.mxu0 %v241
    %302 = vmatprep.subr.bf16.mxu0 0
    %303 = vmatpush2.bf16.msra.mxu0 %v240
    %304 = vmatprep.subr.bf16.mxu0 0
    %305 = vmatpush2.bf16.msra.mxu0 %v239
    %306 = vmatprep.subr.bf16.mxu0 0
    %307 = vmatpush2.bf16.msra.mxu0 %v238
    %308 = vmatprep.subr.bf16.mxu0 0
    %309 = vmatpush2.bf16.msra.mxu0 %v237
    %310 = vmatprep.subr.bf16.mxu0 0
    %311 = vmatpush2.bf16.msra.mxu0 %v236
    %312 = vmatprep.mubr.bf16.mxu0 %v137
    %313 = vmatmul.mubr.bf16.gmra.mxu0 %v136
    %v314 = vpop.f32.mrf.mxu0
    %v315 = vadd.f32 %v114, %v314
    %v316 = vpop.f32.mrf.mxu0
    %v317 = vpop.f32.mrf.mxu0
    %v318 = vadd.f32 %v114, %v317
    %v319 = vpop.f32.mrf.mxu0
    %320 = vmatprep.mubr.bf16.mxu0 %v140
    %321 = vmatmul.mubr.bf16.gmra.mxu0 %v139
    %v322 = vpop.f32.mrf.mxu0
    %v323 = vadd.f32 %v114, %v322
    %v324 = vpop.f32.mrf.mxu0
    %v325 = vpop.f32.mrf.mxu0
    %v326 = vadd.f32 %v114, %v325
    %v327 = vpop.f32.mrf.mxu0
    %328 = vdwg.mxu0
    %329 = vmatprep.subr.bf16.mxu0 0
    %330 = vmatpush1.bf16.msra.mxu0 0
    %331 = vmatprep.subr.bf16.mxu0 0
    %332 = vmatpush1.bf16.msra.mxu0 0
    %333 = vmatprep.subr.bf16.mxu0 0
    %334 = vmatpush1.bf16.msra.mxu0 0
    %335 = vmatprep.subr.bf16.mxu0 0
    %336 = vmatpush1.bf16.msra.mxu0 %v278
    %337 = vmatprep.subr.bf16.mxu0 0
    %338 = vmatpush1.bf16.msra.mxu0 %v247
    %339 = vmatprep.subr.bf16.mxu0 0
    %340 = vmatpush1.bf16.msra.mxu0 %v246
    %341 = vmatprep.subr.bf16.mxu0 0
    %342 = vmatpush1.bf16.msra.mxu0 %v245
    %343 = vmatprep.subr.bf16.mxu0 0
    %344 = vmatpush1.bf16.msra.mxu0 %v244
    %345 = vmatprep.subr.bf16.mxu0 0
    %346 = vmatpush2.bf16.msra.mxu0 0
    %347 = vmatprep.subr.bf16.mxu0 0
    %348 = vmatpush2.bf16.msra.mxu0 0
    %349 = vmatprep.subr.bf16.mxu0 0
    %350 = vmatpush2.bf16.msra.mxu0 0
    %351 = vmatprep.subr.bf16.mxu0 0
    %352 = vmatpush2.bf16.msra.mxu0 0
    %353 = vmatprep.subr.bf16.mxu0 0
    %354 = vmatpush2.bf16.msra.mxu0 0
    %355 = vmatprep.subr.bf16.mxu0 0
    %356 = vmatpush2.bf16.msra.mxu0 0
    %357 = vmatprep.subr.bf16.mxu0 0
    %358 = vmatpush2.bf16.msra.mxu0 0
    %359 = vmatprep.subr.bf16.mxu0 0
    %360 = vmatpush2.bf16.msra.mxu0 0
    %361 = vmatprep.mubr.bf16.mxu0 0
    %362 = vmatmul.mubr.bf16.gmra.mxu0 %v271
    %v363 = vpop.f32.mrf.mxu0
    %v364 = vadd.f32 %v315, %v363
    %v365 = vpop.f32.mrf.mxu0
    %v366 = vpop.f32.mrf.mxu0
    %v367 = vadd.f32 %v318, %v366
    %v368 = vpop.f32.mrf.mxu0
    %369 = vmatprep.mubr.bf16.mxu0 0
    %370 = vmatmul.mubr.bf16.gmra.mxu0 %v274
    %v371 = vpop.f32.mrf.mxu0
    %v372 = vadd.f32 %v323, %v371
    %v373 = vpop.f32.mrf.mxu0
    %v374 = vpop.f32.mrf.mxu0
    %v375 = vadd.f32 %v326, %v374
    %v376 = vpop.f32.mrf.mxu0
    %377 = vdwg.mxu0
    %v378 = vmul.f32 %v364, %v364
    %v379 = vmul.f32 %v367, %v367
    %v380 = vmul.f32 %v372, %v372
    %v381 = vmul.f32 %v375, %v375
    %v382 = vpack.c.bf16 %v379, %v378
    %v383 = vpack.c.bf16 %v381, %v380
    %v384 = vld [vmem:[#allocation7] sm:$0xf]
    %v385 = vld [vmem:[#allocation7 + $0x4] sm:$0xf]
    %v386 = vld [vmem:[#allocation7 + $0x8] sm:$0xf]
    %v387 = vld [vmem:[#allocation7 + $0xc] sm:$0xf]
    %v388 = vld [vmem:[#allocation7 + $0x10] sm:$0xf]
    %v389 = vld [vmem:[#allocation7 + $0x14] sm:$0xf]
    %v390 = vld [vmem:[#allocation7 + $0x18] sm:$0xf]
    %v391 = vld [vmem:[#allocation7 + $0x1c] sm:$0xf]
    %v392 = vld [vmem:[#allocation7 + $0x20] sm:$0xf]
    %v393 = vld [vmem:[#allocation7 + $0x24] sm:$0xf]
    %v394 = vld [vmem:[#allocation7 + $0x28] sm:$0xf]
    %v395 = vld [vmem:[#allocation7 + $0x2c] sm:$0xf]
    %v396 = vld [vmem:[#allocation7 + $0x30] sm:$0xf]
    %v397 = vld [vmem:[#allocation7 + $0x34] sm:$0xf]
    %v398 = vld [vmem:[#allocation7 + $0x38] sm:$0xf]
    %v399 = vld [vmem:[#allocation7 + $0x3c] sm:$0xf]
    %v416 = vunpack.c.l.b16 %v384
    %v417 = vunpack.c.l.b16 %v385
    %v418 = vunpack.c.l.b16 %v386
    %v419 = vunpack.c.l.b16 %v387
    %v420 = vunpack.c.l.b16 %v388
    %v421 = vunpack.c.l.b16 %v389
    %v422 = vunpack.c.l.b16 %v390
    %v423 = vunpack.c.l.b16 %v391
    %v424 = vunpack.c.l.b16 %v392
    %v425 = vunpack.c.l.b16 %v393
    %v426 = vunpack.c.l.b16 %v394
    %v427 = vunpack.c.l.b16 %v395
    %v428 = vunpack.c.l.b16 %v396
    %v429 = vunpack.c.l.b16 %v397
    %v430 = vunpack.c.l.b16 %v398
    %v431 = vunpack.c.l.b16 %v399
    %v432 = vpack.c.b16 %v417, %v416
    %v433 = vpack.c.b16 %v419, %v418
    %v434 = vpack.c.b16 %v421, %v420
    %v435 = vpack.c.b16 %v423, %v422
    %v436 = vpack.c.b16 %v425, %v424
    %v437 = vpack.c.b16 %v427, %v426
    %v438 = vpack.c.b16 %v429, %v428
    %v439 = vpack.c.b16 %v431, %v430
    %448 = vmatprep.subr.bf16.mxu0 0
    %449 = vmatpush1.bf16.msra.mxu0 %v439
    %450 = vmatprep.subr.bf16.mxu0 0
    %451 = vmatpush1.bf16.msra.mxu0 %v438
    %452 = vmatprep.subr.bf16.mxu0 0
    %453 = vmatpush1.bf16.msra.mxu0 %v437
    %454 = vmatprep.subr.bf16.mxu0 0
    %455 = vmatpush1.bf16.msra.mxu0 %v436
    %456 = vmatprep.subr.bf16.mxu0 0
    %457 = vmatpush1.bf16.msra.mxu0 %v435
    %458 = vmatprep.subr.bf16.mxu0 0
    %459 = vmatpush1.bf16.msra.mxu0 %v434
    %460 = vmatprep.subr.bf16.mxu0 0
    %461 = vmatpush1.bf16.msra.mxu0 %v433
    %462 = vmatprep.subr.bf16.mxu0 0
    %463 = vmatpush1.bf16.msra.mxu0 %v432
    %464 = vmatprep.subr.bf16.mxu0 0
    %465 = vmatpush2.bf16.msra.mxu0 0
    %466 = vmatprep.subr.bf16.mxu0 0
    %467 = vmatpush2.bf16.msra.mxu0 0
    %468 = vmatprep.subr.bf16.mxu0 0
    %469 = vmatpush2.bf16.msra.mxu0 0
    %470 = vmatprep.subr.bf16.mxu0 0
    %471 = vmatpush2.bf16.msra.mxu0 0
    %472 = vmatprep.subr.bf16.mxu0 0
    %473 = vmatpush2.bf16.msra.mxu0 0
    %474 = vmatprep.subr.bf16.mxu0 0
    %475 = vmatpush2.bf16.msra.mxu0 0
    %476 = vmatprep.subr.bf16.mxu0 0
    %477 = vmatpush2.bf16.msra.mxu0 0
    %478 = vmatprep.subr.bf16.mxu0 0
    %479 = vmatpush2.bf16.msra.mxu0 0
    %480 = vmatprep.mubr.bf16.mxu0 0
    %481 = vmatmul.mubr.bf16.gmra.mxu0 %v382
    %v482 = vpop.f32.mrf.mxu0
    %v483 = vadd.f32 0.0, %v482
    %v484 = vpop.f32.mrf.mxu0
    %v485 = vpop.f32.mrf.mxu0
    %v486 = vadd.f32 0.0, %v485
    %v487 = vpop.f32.mrf.mxu0
    %488 = vmatprep.mubr.bf16.mxu0 0
    %489 = vmatmul.mubr.bf16.gmra.mxu0 %v383
    %v490 = vpop.f32.mrf.mxu0
    %v491 = vadd.f32 0.0, %v490
    %v492 = vpop.f32.mrf.mxu0
    %v493 = vpop.f32.mrf.mxu0
    %v494 = vadd.f32 0.0, %v493
    %v495 = vpop.f32.mrf.mxu0
    %496 = vdwg.mxu0
    %v497 = vadd.f32 %v483, 1.0
    %v498 = vadd.f32 %v486, 1.0
    %v499 = vadd.f32 %v491, 1.0
    %v500 = vadd.f32 %v494, 1.0
    %v501 = vrsqrt.pop %v483
    %v502 = vmul.f32 %v483, %v501
    %vm503 = vcmp.eq.f32.partialorder %v483, inf
    %v504 = vsel %vm503, %v483, %v502
    %vm505 = vcmp.eq.f32.partialorder %v483, 0.0
    %v506 = vand.u32 %v483, 2147483648
    %v507 = vsel %vm505, %v506, %v504
    %v508 = vrsqrt.pop %v486
    %v509 = vmul.f32 %v486, %v508
    %vm510 = vcmp.eq.f32.partialorder %v486, inf
    %v511 = vsel %vm510, %v486, %v509
    %vm512 = vcmp.eq.f32.partialorder %v486, 0.0
    %v513 = vand.u32 %v486, 2147483648
    %v514 = vsel %vm512, %v513, %v511
    %v515 = vrsqrt.pop %v491
    %v516 = vmul.f32 %v491, %v515
    %vm517 = vcmp.eq.f32.partialorder %v491, inf
    %v518 = vsel %vm517, %v491, %v516
    %vm519 = vcmp.eq.f32.partialorder %v491, 0.0
    %v520 = vand.u32 %v491, 2147483648
    %v521 = vsel %vm519, %v520, %v518
    %v522 = vrsqrt.pop %v494
    %v523 = vmul.f32 %v494, %v522
    %vm524 = vcmp.eq.f32.partialorder %v494, inf
    %v525 = vsel %vm524, %v494, %v523
    %vm526 = vcmp.eq.f32.partialorder %v494, 0.0
    %v527 = vand.u32 %v494, 2147483648
    %v528 = vsel %vm526, %v527, %v525
    %v529 = vadd.f32 %v507, 1e-08
    %v530 = vadd.f32 %v514, 1e-08
    %v531 = vadd.f32 %v521, 1e-08
    %v532 = vadd.f32 %v528, 1e-08
    %v533 = vmul.f32 %v497, %v529
    %v534 = vmul.f32 %v498, %v530
    %v535 = vmul.f32 %v499, %v531
    %v536 = vmul.f32 %v500, %v532
    %v537 = vrcp.pop %v533
    %v538 = vrcp.pop %v534
    %v539 = vrcp.pop %v535
    %v540 = vrcp.pop %v536
    %v541 = vmul.f32 %v483, %v537
    %v542 = vmul.f32 %v486, %v538
    %v543 = vmul.f32 %v491, %v539
    %v544 = vmul.f32 %v494, %v540
    %v545 = vmul.f32 %v364, %v541
    %v546 = vmul.f32 %v367, %v542
    %v547 = vmul.f32 %v372, %v543
    %v548 = vmul.f32 %v375, %v544
    %549 = vst [vmem:[#allocation8] sm:$0xff] %v545
    %550 = vst [vmem:[#allocation8 + $0x8] sm:$0xff] %v546
    %551 = vst [vmem:[#allocation8 + $0x10] sm:$0xff] %v547
    %552 = vst [vmem:[#allocation8 + $0x18] sm:$0xff] %v548
    // Predicated region
    $region30: #{tpu_custom_call.1} parent=1 // pred_check
      _
    $region31: #{tpu_custom_call.1} parent=1 // pred_check_branch
      %554 = sbr.rel (0) target = $region33
    $region32: #{tpu_custom_call.1} parent=1 // pred_region
      %s556 = ssub.s32 512, 512
      %557 = vsyncadd [#allocation4], %s556
      %s558 = sshll.u32 [#allocation8], 4
      %s559 = int_to_ptr.vmem [resolvable:$true] %s558
      %564 = dma.vmem_to_hbm [thread:$0]  %s559, 512, %s4, [#allocation4], 128, 128, 8
    $region33: #{tpu_custom_call.1} parent=1 // pred_fallthru
      _
    // Predicated region
    $region34: #{tpu_custom_call.1} parent=1 // pred_check
      _
    $region35: #{tpu_custom_call.1} parent=1 // pred_check_branch
      %566 = sbr.rel (0) target = $region37
    $region36: #{tpu_custom_call.1} parent=1 // pred_region
      %567 = dma.done [#allocation4], 512
    $region37: #{tpu_custom_call.1} parent=1 // pred_fallthru
      _
    %568 = vsyncpa [#allocation3], 1
    %569 = vsyncpa [#allocation6], 1
    %570 = vsyncpa [#allocation4], 1

</llo_original>
